<compile_context>
chip_gen: v5e
topology: v5e:2x2
jax: 0.10.0
libtpu: 0.0.40
codegen_flags: <defaults>
</compile_context>

<pallas_src>
import functools

import jax
import jax.numpy as jnp
from jax import lax
from jax.experimental import pallas as pl
from jax.experimental.pallas import tpu as pltpu


_MASK_VALUE = float(jnp.finfo(jnp.float32).min)               # eager-path mask value
_FLASH_MASK_FLOOR = -0.7 * float(jnp.finfo(jnp.float32).max)  # finite, no -inf math


@functools.lru_cache(maxsize=None)
def _vmem_limit_bytes():
    """Generation-aware scoped-VMEM limit (leave headroom for compiler scratch
    and double-buffered BlockSpec windows): ~45 MiB on v7x (64 MiB physical per
    TensorCore), ~90 MiB on v5e/v6e (128 MiB physical)."""
    cap = 128 * 1024 * 1024
    try:
        info = pltpu.get_tpu_info()
        cap = int(getattr(info, "vmem_capacity_bytes", cap))
    except Exception:
        pass
    return min(int(cap * 0.70), 100 * 1024 * 1024)


def _pick_tile(dim, target, unit):
    """Largest multiple of `unit` dividing `dim` that is <= target; falls back
    to the full dim (single block).  Guards the fallback so an oddly sized,
    huge dim does not silently become a whole-dim VMEM block."""
    if dim <= target:
        return dim
    t = (target // unit) * unit
    while t >= unit:
        if dim % t == 0:
            return t
        t -= unit
    if dim > 4 * target:
        raise ValueError(
            f"dim={dim} has no tile <= {target} (unit {unit}); pad it to a "
            f"multiple of {unit} instead of using a whole-dim block.")
    return dim


def _eager_q_tile(S, target, vmem_limit):
    # Per-q-row footprint grows with S: f32 scores (4*S) + double-buffered
    # weights block (2*2*S) bytes; keep it under ~1/4 of the scoped limit.
    cap = max(16, (vmem_limit // 4) // (8 * max(S, 1)))
    return _pick_tile(S, min(target, cap), 16)


# ----------------------------------------------------------------------------
# Tiled matmul kernel (fused qkv_proj and o_proj):  y = x @ W
# ----------------------------------------------------------------------------
def _matmul_kernel(x_ref, w_ref, o_ref, acc_ref):
    @pl.when(pl.program_id(2) == 0)
    def _():
        acc_ref[...] = jnp.zeros_like(acc_ref)

    acc_ref[...] += jnp.dot(x_ref[...], w_ref[...],
                            preferred_element_type=jnp.float32)

    @pl.when(pl.program_id(2) == pl.num_programs(2) - 1)
    def _():
        o_ref[...] = acc_ref[...].astype(o_ref.dtype)


def pallas_matmul(x, w, *, tm_target=256, tn_target=512, tk_target=512):
    """x: (M, K), w: (K, N) -> (M, N).  bf16 MXU inputs, f32 accumulation."""
    M, K = x.shape
    K2, N = w.shape
    assert K == K2
    tm = _pick_tile(M, tm_target, 16)      # bf16 sublane packing: multiples of 16
    tn = _pick_tile(N, tn_target, 128)
    tk = _pick_tile(K, tk_target, 128)
    grid = (M // tm, N // tn, K // tk)
    return pl.pallas_call(
        _matmul_kernel,
        out_shape=jax.ShapeDtypeStruct((M, N), x.dtype),
        grid=grid,
        in_specs=[
            pl.BlockSpec((tm, tk), lambda i, j, kk: (i, kk)),
            pl.BlockSpec((tk, tn), lambda i, j, kk: (kk, j)),
        ],
        out_specs=pl.BlockSpec((tm, tn), lambda i, j, kk: (i, j)),
        scratch_shapes=[pltpu.VMEM((tm, tn), jnp.float32)],
        compiler_params=pltpu.CompilerParams(
            dimension_semantics=("parallel", "parallel", "arbitrary"),
            vmem_limit_bytes=_vmem_limit_bytes()),
    )(x, w)


# ----------------------------------------------------------------------------
# In-kernel RoPE helper:  x*cos + rotate_half(x)*sin  (all f32, (rows, D))
# ----------------------------------------------------------------------------
def _rotary(x, cos, sin):
    d = x.shape[-1]
    half = d // 2
    if d % 128 == 0:
        # rotate_half via an XLU lane rotation + VPU sign select (no slice /
        # concat crossing the 128-lane tile boundary).
        rot = pltpu.roll(x, shift=half, axis=x.ndim - 1)          # [x2, x1]
        col = lax.broadcasted_iota(jnp.int32, x.shape, x.ndim - 1)
        rot = jnp.where(col < half, -rot, rot)                    # [-x2, x1]
    else:
        x1 = x[:, :half]
        x2 = x[:, half:]
        rot = jnp.concatenate([-x2, x1], axis=-1)
    return x * cos + rot * sin


# ----------------------------------------------------------------------------
# Eager attention kernel (returns attn_weights) -- grid (B, KVH, G, S//tq)
# ----------------------------------------------------------------------------
def _eager_attn_kernel(q_ref, k_ref, v_ref, cq_ref, sq_ref, ck_ref, sk_ref,
                       *rest, scaling, q_tile, with_mask):
    if with_mask:
        mask_ref, o_ref, w_ref, k_rope = rest
    else:
        o_ref, w_ref, k_rope = rest
        mask_ref = None

    g = pl.program_id(2)
    qi = pl.program_id(3)

    # RoPE K once per (batch, kv-head): the K block only changes with the two
    # outer grid axes, so recompute only on the first inner step.
    @pl.when((g == 0) & (qi == 0))
    def _():
        k_rope[...] = _rotary(k_ref[...].astype(jnp.float32),
                              ck_ref[...].astype(jnp.float32),
                              sk_ref[...].astype(jnp.float32)).astype(k_rope.dtype)

    q = _rotary(q_ref[...].astype(jnp.float32),
                cq_ref[...].astype(jnp.float32),
                sq_ref[...].astype(jnp.float32)).astype(q_ref.dtype)  # (tq, D)

    # Contract the last dims of both operands: no k.T / XLU transpose; bf16 MXU
    # inputs with f32 accumulation.
    s = lax.dot_general(q, k_rope[...], (((1,), (1,)), ((), ())),
                        preferred_element_type=jnp.float32) * scaling
    if with_mask:
        s = s + mask_ref[...].astype(jnp.float32)
    else:
        row = qi * q_tile + lax.broadcasted_iota(jnp.int32, s.shape, 0)
        col = lax.broadcasted_iota(jnp.int32, s.shape, 1)
        s = jnp.where(row >= col, s, _MASK_VALUE)

    p = jax.nn.softmax(s, axis=-1).astype(q_ref.dtype)      # HF eager semantics
    o = jnp.dot(p, v_ref[...], preferred_element_type=jnp.float32)
    o_ref[...] = o.astype(o_ref.dtype)
    w_ref[...] = p


# ----------------------------------------------------------------------------
# Flash attention kernel (no attn_weights) -- grid (B, KVH, G, S//tq),
# KV tiles looped in-kernel from a (n_kv, tkv, D) staging scratch.
# ----------------------------------------------------------------------------
def _flash_attn_kernel(q_ref, k_ref, v_ref, cq_ref, sq_ref, ck_ref, sk_ref,
                       *rest, scaling, q_tile, kv_tile, with_mask):
    if with_mask:
        mask_ref, o_ref, k_tiles, v_tiles = rest
    else:
        o_ref, k_tiles, v_tiles = rest
        mask_ref = None

    g = pl.program_id(2)
    qi = pl.program_id(3)
    n_kv_total = k_tiles.shape[0]
    head_dim = q_ref.shape[-1]

    # Stage RoPE'd K and (copied) V into (n_kv, tkv, D) scratch once per
    # (batch, kv-head); the inner loop then indexes the leading tile axis.
    @pl.when((g == 0) & (qi == 0))
    def _():
        ck = ck_ref[...].astype(jnp.float32)
        sk = sk_ref[...].astype(jnp.float32)
        for jj in range(n_kv_total):                     # static unroll
            rows = slice(jj * kv_tile, (jj + 1) * kv_tile)
            kf = k_ref[rows, :].astype(jnp.float32)
            k_tiles[jj] = _rotary(kf, ck[rows, :], sk[rows, :]).astype(k_tiles.dtype)
            v_tiles[jj] = v_ref[rows, :]

    q = _rotary(q_ref[...].astype(jnp.float32),
                cq_ref[...].astype(jnp.float32),
                sq_ref[...].astype(jnp.float32)).astype(q_ref.dtype)  # (tq, D)

    if with_mask:
        n_kv = n_kv_total
    else:
        # Causal: only KV tiles intersecting rows [qi*tq, qi*tq + tq) -- skips
        # the tiles entirely above the diagonal (MXU, exp and rescale work).
        n_kv = ((qi + 1) * q_tile + kv_tile - 1) // kv_tile

    def body(j, carry):
        m, l, acc = carry
        k = k_tiles[j]                                   # (tkv, D) bf16, RoPE'd
        v = v_tiles[j]                                   # (tkv, D)
        s = lax.dot_general(q, k, (((1,), (1,)), ((), ())),
                            preferred_element_type=jnp.float32) * scaling
        if with_mask:
            off = pl.multiple_of(j * kv_tile, kv_tile)
            s = jnp.maximum(s + mask_ref[:, pl.ds(off, kv_tile)].astype(jnp.float32),
                            _FLASH_MASK_FLOOR)
        else:
            row = qi * q_tile + lax.broadcasted_iota(jnp.int32, s.shape, 0)
            col = j * kv_tile + lax.broadcasted_iota(jnp.int32, s.shape, 1)
            s = jnp.where(row >= col, s, _FLASH_MASK_FLOOR)
        m_new = jnp.maximum(m, s.max(axis=-1, keepdims=True))
        alpha = jnp.exp(m - m_new)
        p = jnp.exp(s - m_new)                           # (tq, tkv) f32
        l_new = alpha * l + p.sum(axis=-1, keepdims=True)
        acc_new = alpha * acc + jnp.dot(p.astype(v.dtype), v,
                                        preferred_element_type=jnp.float32)
        return m_new, l_new, acc_new

    m0 = jnp.full((q_tile, 1), _FLASH_MASK_FLOOR, dtype=jnp.float32)
    l0 = jnp.zeros((q_tile, 1), dtype=jnp.float32)
    a0 = jnp.zeros((q_tile, head_dim), dtype=jnp.float32)
    _, l, acc = lax.fori_loop(0, n_kv, body, (m0, l0, a0))
    o_ref[...] = (acc / l).astype(o_ref.dtype)   # exact divide, once per q-tile


# ----------------------------------------------------------------------------
# Attention dispatcher (fused RoPE + GQA head indexing, (B,S,H,D) output)
# ----------------------------------------------------------------------------
def pallas_attention(qkv, cos, sin, attention_mask=None, *, num_heads,
                     num_kv_heads, head_dim, scaling, return_weights=True,
                     q_tile_target=256, kv_tile_target=512):
    """qkv: (B, S, H + 2*KVH, D), heads ordered [q..., k..., v...], RoPE not yet
    applied (fused in-kernel).  cos/sin: (S, D).
    Returns (attn_out (B, S, H, D), attn_weights (B, H, S, S) or None)."""
    B, S, NHT, D = qkv.shape
    H, KVH = num_heads, num_kv_heads
    G = H // KVH
    assert NHT == H + 2 * KVH and D == head_dim
    with_mask = attention_mask is not None
    vmem_limit = _vmem_limit_bytes()

    # index_maps (squeezed head/batch dims: kernel tiles stay (rows, D)).
    def q_map(b, kvh, g, i): return (b, i, kvh * G + g, 0)
    def k_map(b, kvh, g, i): return (b, 0, H + kvh, 0)          # constant over (g,i)
    def v_map(b, kvh, g, i): return (b, 0, H + KVH + kvh, 0)    # -> no KV re-stream
    def o_map(b, kvh, g, i): return (b, i, kvh * G + g, 0)
    def cq_map(b, kvh, g, i): return (i, 0)
    def ck_map(b, kvh, g, i): return (0, 0)
    def m_map(b, kvh, g, i): return (b, 0, i, 0)
    def w_map(b, kvh, g, i): return (b, kvh * G + g, i, 0)

    compiler_params = pltpu.CompilerParams(
        # b / kvh are independent (megacore-splittable); g / q-tile must stay
        # in-order because the K-RoPE scratch is filled on the first inner step.
        dimension_semantics=("parallel", "parallel", "arbitrary", "arbitrary"),
        vmem_limit_bytes=vmem_limit)

    if return_weights:
        tq = _eager_q_tile(S, q_tile_target, vmem_limit)
        grid = (B, KVH, G, S // tq)
        in_specs = [
            pl.BlockSpec((None, tq, None, D), q_map),
            pl.BlockSpec((None, S, None, D), k_map),
            pl.BlockSpec((None, S, None, D), v_map),
            pl.BlockSpec((tq, D), cq_map), pl.BlockSpec((tq, D), cq_map),
            pl.BlockSpec((S, D), ck_map), pl.BlockSpec((S, D), ck_map),
        ]
        args = [qkv, qkv, qkv, cos, sin, cos, sin]
        if with_mask:
            # TODO(synk): for real masks a compact per-row form expanded in-kernel
            # would avoid streaming a dense (B,1,S,S) f32 tensor per head.
            in_specs.append(pl.BlockSpec((None, None, tq, S), m_map))
            args.append(attention_mask)
        kernel = functools.partial(_eager_attn_kernel, scaling=scaling,
                                   q_tile=tq, with_mask=with_mask)
        o, w = pl.pallas_call(
            kernel,
            out_shape=(jax.ShapeDtypeStruct((B, S, H, D), qkv.dtype),
                       jax.ShapeDtypeStruct((B, H, S, S), qkv.dtype)),
            grid=grid,
            in_specs=in_specs,
            out_specs=(pl.BlockSpec((None, tq, None, D), o_map),
                       pl.BlockSpec((None, None, tq, S), w_map)),
            scratch_shapes=[pltpu.VMEM((S, D), qkv.dtype)],      # RoPE'd K
            compiler_params=compiler_params,
        )(*args)
        return o, w

    # Flash path: K/V fetched once per (batch, kv-head), KV tiles looped
    # in-kernel, probs never written to HBM, causal tiles skipped.
    tq = _pick_tile(S, q_tile_target, 16)
    tkv = _pick_tile(S, kv_tile_target, 128)
    n_kv = S // tkv
    grid = (B, KVH, G, S // tq)
    in_specs = [
        pl.BlockSpec((None, tq, None, D), q_map),
        pl.BlockSpec((None, S, None, D), k_map),
        pl.BlockSpec((None, S, None, D), v_map),
        pl.BlockSpec((tq, D), cq_map), pl.BlockSpec((tq, D), cq_map),
        pl.BlockSpec((S, D), ck_map), pl.BlockSpec((S, D), ck_map),
    ]
    args = [qkv, qkv, qkv, cos, sin, cos, sin]
    if with_mask:
        in_specs.append(pl.BlockSpec((None, None, tq, S), m_map))
        args.append(attention_mask)
    kernel = functools.partial(_flash_attn_kernel, scaling=scaling,
                               q_tile=tq, kv_tile=tkv, with_mask=with_mask)
    o = pl.pallas_call(
        kernel,
        out_shape=jax.ShapeDtypeStruct((B, S, H, D), qkv.dtype),
        grid=grid,
        in_specs=in_specs,
        out_specs=pl.BlockSpec((None, tq, None, D), o_map),
        scratch_shapes=[pltpu.VMEM((n_kv, tkv, D), qkv.dtype),   # RoPE'd K tiles
                        pltpu.VMEM((n_kv, tkv, D), qkv.dtype)],  # V tiles
        compiler_params=compiler_params,
    )(*args)
    return o, None


# ----------------------------------------------------------------------------
# Module wrapper (parameter holder + forward glue; no XLA transposes)
# ----------------------------------------------------------------------------
class PallasLlamaAttention:
    def __init__(self, key, hidden_size, num_heads, num_kv_heads, head_dim,
                 dtype=jnp.bfloat16):
        self.hidden_size = hidden_size
        self.num_heads = num_heads
        self.num_kv_heads = num_kv_heads
        self.head_dim = head_dim
        self.scaling = head_dim ** -0.5
        self.dtype = dtype

        k1, k2, k3, k4 = jax.random.split(key, 4)
        s = 0.02
        self.wq = (s * jax.random.normal(k1, (hidden_size, num_heads * head_dim),
                                         jnp.float32)).astype(dtype)
        self.wk = (s * jax.random.normal(k2, (hidden_size, num_kv_heads * head_dim),
                                         jnp.float32)).astype(dtype)
        self.wv = (s * jax.random.normal(k3, (hidden_size, num_kv_heads * head_dim),
                                         jnp.float32)).astype(dtype)
        self.wo = (s * jax.random.normal(k4, (num_heads * head_dim, hidden_size),
                                         jnp.float32)).astype(dtype)
        # Fused QKV weight: one matmul, hidden_states streamed from HBM once.
        self.w_qkv = jnp.concatenate([self.wq, self.wk, self.wv], axis=1)

    def __call__(self, hidden_states, position_embeddings, attention_mask=None,
                 return_attn_weights=True):
        B, S, Hd = hidden_states.shape
        cos, sin = position_embeddings
        if cos.ndim == 3:          # drop the batch broadcast of the RoPE tables
            cos, sin = cos[0], sin[0]
        cos = cos.astype(self.dtype)
        sin = sin.astype(self.dtype)

        x2d = hidden_states.reshape(B * S, Hd)
        qkv = pallas_matmul(x2d, self.w_qkv)          # (B*S, (H + 2*KVH) * D)
        nht = self.num_heads + 2 * self.num_kv_heads
        qkv = qkv.reshape(B, S, nht, self.head_dim)   # free view; no transposes

        # TODO(synk): kv_quant / OnlineCalibrator (qk_calib, k_calib) /
        # PostSmoothLayer / pseudo-quant KV cache update / dropout are not
        # exercised in this (pristine, post-RoPE, no-cache, eval) config.
        attn_out, attn_weights = pallas_attention(
            qkv, cos, sin, attention_mask,
            num_heads=self.num_heads, num_kv_heads=self.num_kv_heads,
            head_dim=self.head_dim, scaling=self.scaling,
            return_weights=return_attn_weights)

        # attn_out is already (B, S, H, D): free reshape into the o_proj matmul.
        out = pallas_matmul(
            attn_out.reshape(B * S, self.num_heads * self.head_dim),
            self.wo).reshape(B, S, Hd)
        return out, attn_weights


# ----------------------------------------------------------------------------
# Helpers for the demo / self-check
# ----------------------------------------------------------------------------
def make_rope(S, D, dtype, base=10000.0):
    inv_freq = 1.0 / (base ** (jnp.arange(0, D, 2, dtype=jnp.float32) / D))
    pos = jnp.arange(S, dtype=jnp.float32)
    freqs = pos[:, None] * inv_freq[None, :]          # (S, D/2)
    emb = jnp.concatenate([freqs, freqs], axis=-1)    # (S, D)
    return jnp.cos(emb).astype(dtype), jnp.sin(emb).astype(dtype)


def make_causal_mask(B, S):
    neg = jnp.finfo(jnp.float32).min
    m = jnp.where(jnp.tril(jnp.ones((S, S), dtype=jnp.bool_)), 0.0, neg)
    return jnp.broadcast_to(m[None, None], (B, 1, S, S)).astype(jnp.float32)


def _reference_forward(m, hidden_states, cos, sin):
    """Pure-JAX reference of the exercised forward path (causal, no cache)."""
    B, S, Hd = hidden_states.shape
    H, KVH, D = m.num_heads, m.num_kv_heads, m.head_dim
    G = H // KVH
    x = hidden_states.reshape(B * S, Hd)

    def lin(a, w):
        return jnp.dot(a, w, preferred_element_type=jnp.float32).astype(m.dtype)

    q = lin(x, m.wq).reshape(B, S, H, D).transpose(0, 2, 1, 3)
    k = lin(x, m.wk).reshape(B, S, KVH, D).transpose(0, 2, 1, 3)
    v = lin(x, m.wv).reshape(B, S, KVH, D).transpose(0, 2, 1, 3)

    cosf = cos.astype(jnp.float32)[None, None]
    sinf = sin.astype(jnp.float32)[None, None]
    half = D // 2

    def rope(t):
        tf = t.astype(jnp.float32)
        rot = jnp.concatenate([-tf[..., half:], tf[..., :half]], axis=-1)
        return (tf * cosf + rot * sinf).astype(m.dtype)

    q, k = rope(q), rope(k)
    k = jnp.repeat(k, G, axis=1)
    v = jnp.repeat(v, G, axis=1)

    s = jnp.einsum("bhqd,bhkd->bhqk", q, k,
                   preferred_element_type=jnp.float32) * m.scaling
    causal = jnp.tril(jnp.ones((S, S), dtype=bool))
    s = jnp.where(causal[None, None], s, jnp.finfo(jnp.float32).min)
    p = jax.nn.softmax(s, axis=-1).astype(m.dtype)
    o = jnp.einsum("bhqk,bhkd->bhqd", p, v,
                   preferred_element_type=jnp.float32).astype(m.dtype)
    o = o.transpose(0, 2, 1, 3).reshape(B * S, H * D)
    out = lin(o, m.wo).reshape(B, S, Hd)
    return out, p


def _maxdiff(a, b):
    return float(jnp.max(jnp.abs(a.astype(jnp.float32) - b.astype(jnp.float32))))


if __name__ == "__main__":
    B, S = 2, 8
    num_heads, num_kv_heads, head_dim = 4, 2, 128      # GQA (2 groups), lane-aligned D
    hidden_size = num_heads * head_dim                  # 512
    dtype = jnp.bfloat16

    key = jax.random.PRNGKey(0)
    kp, kx = jax.random.split(key)

    attn = PallasLlamaAttention(kp, hidden_size, num_heads, num_kv_heads,
                                head_dim, dtype=dtype)

    hidden_states = jax.random.normal(kx, (B, S, hidden_size),
                                      jnp.float32).astype(dtype)
    cos, sin = make_rope(S, head_dim, dtype)

    # 1) Eager path: in-kernel causal mask, attn_weights materialized.
    out, weights = attn(hidden_states, (cos, sin), attention_mask=None,
                        return_attn_weights=True)
    # 2) Same path with an explicit additive causal mask (masked-input path).
    mask = make_causal_mask(B, S)
    out_m, _ = attn(hidden_states, (cos, sin), attention_mask=mask,
                    return_attn_weights=True)
    # 3) Flash path: KV streamed once per KV head, probs never touch HBM.
    out_f, w_none = attn(hidden_states, (cos, sin), attention_mask=None,
                         return_attn_weights=False)
    jax.block_until_ready((out, weights, out_m, out_f))

    assert out.shape == (B, S, hidden_size)
    assert weights.shape == (B, num_heads, S, S)
    assert w_none is None

    ref_out, ref_w = _reference_forward(attn, hidden_states, cos, sin)
    assert _maxdiff(out, ref_out) < 2e-2, _maxdiff(out, ref_out)
    assert _maxdiff(weights, ref_w) < 2e-2, _maxdiff(weights, ref_w)
    assert _maxdiff(out_m, out) < 1e-2, _maxdiff(out_m, out)
    assert _maxdiff(out_f, out) < 3e-2, _maxdiff(out_f, out)

    print("KERNEL_OK")
</pallas_src>

<mosaic_0001>
module attributes {stable_mosaic.version = 11 : i64} {
  func.func @_matmul_kernel(%arg0: i32, %arg1: i32, %arg2: i32, %arg3: memref<16x512xbf16, #tpu.memory_space<vmem>>, %arg4: memref<512x512xbf16, #tpu.memory_space<vmem>>, %arg5: memref<16x512xbf16, #tpu.memory_space<vmem>>, %arg6: memref<16x512xf32, #tpu.memory_space<vmem>>) attributes {dimension_semantics = [#tpu.dimension_semantics<parallel>, #tpu.dimension_semantics<parallel>, #tpu.dimension_semantics<arbitrary>], iteration_bounds = array<i64: 1, 2, 1>, scalar_prefetch = 0 : i64, scratch_operands = 1 : i64, tpu.core_type = #tpu.core_type<tc>, window_params = [{transform_indices = @transform_0, window_bounds = array<i64: 16, 512>}, {transform_indices = @transform_1, window_bounds = array<i64: 512, 512>}, {transform_indices = @transform_2, window_bounds = array<i64: 16, 512>}]} {
    %c0_i32 = arith.constant 0 : i32
    %0 = arith.cmpi eq, %arg2, %c0_i32 : i32
    %1 = arith.extui %0 : i1 to i32
    %c0_i32_0 = arith.constant 0 : i32
    %2 = arith.cmpi ne, %1, %c0_i32_0 : i32
    scf.if %2 {
      %cst_10 = arith.constant 0.000000e+00 : f32
      %12 = vector.broadcast %cst_10 : f32 to vector<16x512xf32>
      %c0_11 = arith.constant 0 : index
      %c0_12 = arith.constant 0 : index
      %13 = vector.load %arg6[%c0_11, %c0_12] : memref<16x512xf32, #tpu.memory_space<vmem>>, vector<16x512xf32>
      tpu.vector_store %arg6[%c0_11, %c0_12], %12 {strides = array<i32>} : memref<16x512xf32, #tpu.memory_space<vmem>>, vector<16x512xf32>,
    } else {
    }
    %c0 = arith.constant 0 : index
    %c0_1 = arith.constant 0 : index
    %3 = vector.load %arg6[%c0, %c0_1] : memref<16x512xf32, #tpu.memory_space<vmem>>, vector<16x512xf32>
    %c0_2 = arith.constant 0 : index
    %c0_3 = arith.constant 0 : index
    %4 = vector.load %arg3[%c0_2, %c0_3] : memref<16x512xbf16, #tpu.memory_space<vmem>>, vector<16x512xbf16>
    %c0_4 = arith.constant 0 : index
    %c0_5 = arith.constant 0 : index
    %5 = vector.load %arg4[%c0_4, %c0_5] : memref<512x512xbf16, #tpu.memory_space<vmem>>, vector<512x512xbf16>
    %cst = arith.constant dense<0.000000e+00> : vector<16x512xf32>
    %6 = tpu.matmul %4, %5, %cst {dimension_numbers = #tpu.dot_dimension_numbers<[1], [0], [0], [1], [0, 0, 1, 1], [], []>} : vector<16x512xbf16>, vector<512x512xbf16>, vector<16x512xf32> -> vector<16x512xf32>
    %7 = arith.addf %3, %6 : vector<16x512xf32>
    %c0_6 = arith.constant 0 : index
    %c0_7 = arith.constant 0 : index
    %8 = vector.load %arg6[%c0_6, %c0_7] : memref<16x512xf32, #tpu.memory_space<vmem>>, vector<16x512xf32>
    tpu.vector_store %arg6[%c0_6, %c0_7], %7 {strides = array<i32>} : memref<16x512xf32, #tpu.memory_space<vmem>>, vector<16x512xf32>,
    %c0_i32_8 = arith.constant 0 : i32
    %9 = arith.cmpi eq, %arg2, %c0_i32_8 : i32
    %10 = arith.extui %9 : i1 to i32
    %c0_i32_9 = arith.constant 0 : i32
    %11 = arith.cmpi ne, %10, %c0_i32_9 : i32
    scf.if %11 {
      %c0_10 = arith.constant 0 : index
      %c0_11 = arith.constant 0 : index
      %12 = vector.load %arg6[%c0_10, %c0_11] : memref<16x512xf32, #tpu.memory_space<vmem>>, vector<16x512xf32>
      %13 = arith.truncf %12 : vector<16x512xf32> to vector<16x512xbf16>
      %c0_12 = arith.constant 0 : index
      %c0_13 = arith.constant 0 : index
      %14 = vector.load %arg5[%c0_12, %c0_13] : memref<16x512xbf16, #tpu.memory_space<vmem>>, vector<16x512xbf16>
      tpu.vector_store %arg5[%c0_12, %c0_13], %13 {strides = array<i32>} : memref<16x512xbf16, #tpu.memory_space<vmem>>, vector<16x512xbf16>,
    } else {
    }
    return
  }
  func.func @transform_0(%arg0: i32, %arg1: i32, %arg2: i32) -> (i32, i32) {
    %c0_i32 = arith.constant 0 : i32
    return %arg0, %arg2 : i32, i32
  }
  func.func @transform_1(%arg0: i32, %arg1: i32, %arg2: i32) -> (i32, i32) {
    %c0_i32 = arith.constant 0 : i32
    return %arg2, %arg1 : i32, i32
  }
  func.func @transform_2(%arg0: i32, %arg1: i32, %arg2: i32) -> (i32, i32) {
    %c0_i32 = arith.constant 0 : i32
    return %arg0, %arg1 : i32, i32
  }
}

</mosaic_0001>

<llo_original>
// kernel: tpu_custom_call.1
$region0: #{tpu_custom_call.1}
  #allocation0 [shape = 'u32[]', space=smem, size = 0x4, offset = 0x4, fixed_abs, tag = 'smem constant byte address 0x4 - core index']
  #allocation1 [shape = 'u32[72,128]{1,0:T(1,128)}', space=vmem, size = 0x9000, scoped, tag = 'internal scratch']
  #allocation2 [shape = 'f32[16,512]{1,0:T(8,128)}', space=vmem, size = 0x8000, scoped, tag = 'scratch operand']
  %s0 = inlined_call_operand.hbm [shape: bf16[16,512], index: 0, kind: input, shape index: {}]
  %s1 = inlined_call_operand.hbm [shape: bf16[512,1024], index: 1, kind: input, shape index: {}]
  %s2 = inlined_call_operand.hbm [shape: bf16[16,1024], index: 2, kind: output, shape index: {}]
  %s3 = sld [smem:[#allocation0]]
  $region57: #{tpu_custom_call.1} parent=0
    _
  %s5 = ssub.s32 1, %s3
  %s6 = scalar_select 0, %s5, %s3
  $region1: #{tpu_custom_call.1} parent=0
    #allocation3 [shape = 'u8[16384]{0}', space=vmem, size = 0x4000, scoped, tag = 'input window, operand 0, single buffered']
    #allocation4 [shape = 's32[2]{0}', space=sflag, size = 0x8, scoped, tag = 'scoped memory for tpu_custom_call.1']
    #allocation5 [shape = 's32[2]{0}', space=sflag, size = 0x8, scoped, tag = 'scoped memory for tpu_custom_call.1']
    #allocation6 [shape = 'u8[1048576]{0}', space=vmem, size = 0x100000, scoped, tag = 'input window, operand 1']
    #allocation7 [shape = 's32[2]{0}', space=sflag, size = 0x8, scoped, tag = 'scoped memory for tpu_custom_call.1']
    #allocation8 [shape = 'u8[32768]{0}', space=vmem, size = 0x8000, scoped, tag = 'output window, operand 0']
    %7 = vsyncpa [#allocation4], 0
    %8 = vsyncpa [#allocation7], 0
    %s9 = scalar_lea.sflag [#allocation7], 1
    %10 = vsyncpa %s9, 0
    %11 = vsyncpa [#allocation5], 0
    %s12 = scalar_lea.sflag [#allocation5], 1
    %13 = vsyncpa %s12, 0
    loop: start=0, step=1, limit=4
    $region2: #{tpu_custom_call.1} parent=1 // loop_pre_header
      _
    $region3: #{tpu_custom_call.1} parent=1 // loop_header
      %s15 = sphi 0, %s19
      %p16 = scmp.ge.s32.totalorder %s15, 4
      %s22 = sphi 0, %s41
      %s23 = sphi 0, %s37
      %s24 = sphi 0, %s33
      %s25 = sphi 0, %s22
      %s26 = sphi 0, %s23
      %s27 = sphi 0, %s24
      %s28 = sphi 0, %s25
      %s29 = sphi 0, %s26
      %s30 = sphi 0, %s27
      %s46 = sphi 0, %s48
      %s49 = sphi 0, %s46
      %s50 = sphi 0, %s49
      %s66 = sphi 0, %s50
      %s74 = sphi 0, %s76
      %s77 = sphi 0, %s74
      %s78 = sphi 0, %s77
      %s94 = sphi 0, %s78
      %s102 = sphi 0, %s104
      %s105 = sphi 0, %s102
      %s106 = sphi 0, %s105
      %s122 = sphi 0, %s106
    $region4: #{tpu_custom_call.1} parent=1 // loop_header_branch
      %18 = sbr.rel (%p16) target = $region8
    $region5: #{tpu_custom_call.1} parent=1 // loop_body
      %s20 = ssub.s32 %s15, 1
      %s21 = ssub.s32 %s15, 2
      %s31 = sadd.s32 1, %s24
      %p32 = scmp.ge.s32.totalorder %s31, 1
      %s33 = scalar_select %p32, 0, %s31
      %s34 = sadd.s32 1, %s23
      %s35 = scalar_select %p32, %s34, %s23
      %p36 = scmp.ge.s32.totalorder %s35, 2
      %s37 = scalar_select %p36, 0, %s35
      %s38 = sadd.s32 1, %s22
      %s39 = scalar_select %p36, %s38, %s22
      %p40 = scmp.ge.s32.totalorder %s39, 1
      %s41 = scalar_select %p40, 0, %s39
      %s42 = ssub.s32 %s22, %s41
      %s43 = ssub.s32 %s24, %s33
      %s44 = sor.u32 %s42, %s43
      %p45 = scmp.eq.s32.totalorder %s44, 0
      %s47 = sadd.s32 %s46, 1
      %s48 = scalar_select %p45, %s46, %s47
      %p51 = pneg %p45
      %p52 = scmp.eq.s32.totalorder %s15, 1
      %p53 = por %p51, %p52
      %p54 = scmp.ne.s32.totalorder %s46, %s49
      %p55 = scmp.eq.s32.totalorder %s15, 0
      %p56 = por %p54, %p55
      %p57 = scmp.ne.s32.totalorder %s46, %s49
      %p58 = scmp.eq.s32.totalorder %s20, 1
      %p59 = por %p57, %p58
      %p60 = scmp.ne.s32.totalorder %s49, %s50
      %p61 = scmp.eq.s32.totalorder %s20, 0
      %p62 = por %p60, %p61
      %p63 = scmp.ne.s32.totalorder %s49, %s50
      %p64 = scmp.eq.s32.totalorder %s21, 1
      %p65 = por %p63, %p64
      %p67 = scmp.ne.s32.totalorder %s50, %s66
      %p68 = scmp.eq.s32.totalorder %s21, 0
      %p69 = por %p67, %p68
      %s70 = ssub.s32 %s24, %s33
      %s71 = ssub.s32 %s23, %s37
      %s72 = sor.u32 %s70, %s71
      %p73 = scmp.eq.s32.totalorder %s72, 0
      %s75 = sadd.s32 %s74, 1
      %s76 = scalar_select %p73, %s74, %s75
      %p79 = pneg %p73
      %p80 = scmp.eq.s32.totalorder %s15, 1
      %p81 = por %p79, %p80
      %p82 = scmp.ne.s32.totalorder %s74, %s77
      %p83 = scmp.eq.s32.totalorder %s15, 0
      %p84 = por %p82, %p83
      %p85 = scmp.ne.s32.totalorder %s74, %s77
      %p86 = scmp.eq.s32.totalorder %s20, 1
      %p87 = por %p85, %p86
      %p88 = scmp.ne.s32.totalorder %s77, %s78
      %p89 = scmp.eq.s32.totalorder %s20, 0
      %p90 = por %p88, %p89
      %p91 = scmp.ne.s32.totalorder %s77, %s78
      %p92 = scmp.eq.s32.totalorder %s21, 1
      %p93 = por %p91, %p92
      %p95 = scmp.ne.s32.totalorder %s78, %s94
      %p96 = scmp.eq.s32.totalorder %s21, 0
      %p97 = por %p95, %p96
      %s98 = ssub.s32 %s22, %s41
      %s99 = ssub.s32 %s23, %s37
      %s100 = sor.u32 %s98, %s99
      %p101 = scmp.eq.s32.totalorder %s100, 0
      %s103 = sadd.s32 %s102, 1
      %s104 = scalar_select %p101, %s102, %s103
      %p107 = pneg %p101
      %p108 = scmp.eq.s32.totalorder %s15, 1
      %p109 = por %p107, %p108
      %p110 = scmp.ne.s32.totalorder %s102, %s105
      %p111 = scmp.eq.s32.totalorder %s15, 0
      %p112 = por %p110, %p111
      %p113 = scmp.ne.s32.totalorder %s102, %s105
      %p114 = scmp.eq.s32.totalorder %s20, 1
      %p115 = por %p113, %p114
      %p116 = scmp.ne.s32.totalorder %s105, %s106
      %p117 = scmp.eq.s32.totalorder %s20, 0
      %p118 = por %p116, %p117
      %p119 = scmp.ne.s32.totalorder %s105, %s106
      %p120 = scmp.eq.s32.totalorder %s21, 1
      %p121 = por %p119, %p120
      %p123 = scmp.ne.s32.totalorder %s106, %s122
      %p124 = scmp.eq.s32.totalorder %s21, 0
      %p125 = por %p123, %p124
      %p126 = scmp.le.s32.totalorder 1, %s15
      %p127 = scmp.lt.s32.totalorder %s15, 3
      %p128 = pnand %p126, %p127
      %p129 = pneg %p128
      // Predicated region
      $region9: #{tpu_custom_call.1} parent=5 // pred_check
        _
      $region10: #{tpu_custom_call.1} parent=5 // pred_check_branch
        %131 = sbr.rel (%p128) target = $region12
      $region11: #{tpu_custom_call.1} parent=5 // pred_region
        %s132 = ssub.s32 %s15, 1
        // Predicated region
        $region13: #{tpu_custom_call.1} parent=11 // pred_check
          %p133 = pneg %p62
        $region14: #{tpu_custom_call.1} parent=11 // pred_check_branch
          %135 = sbr.rel (%p133) target = $region16
        $region15: #{tpu_custom_call.1} parent=11 // pred_region
          %s136 = smul.u32 2, %s25
          %s137 = smul.u32 4, %s27
          %139 = vsyncadd [#allocation4], 0
          %s140 = smul.addr %s136, 4
          %s141 = sadd.s32 %s137, %s140
          %s142 = smul.addr %s141, 4
          %s143 = scalar_lea.hbm %s0, %s142
          %s144 = sshll.u32 %s143, 4
          %s145 = int_to_ptr.hbm [resolvable:$true] %s144
          %s146 = sshll.u32 [#allocation3], 4
          %s147 = int_to_ptr.vmem [resolvable:$true] %s146
          %152 = dma.hbm_to_vmem [thread:$0]  %s145, 512, %s147, [#allocation4], 256, 256, 16
        $region16: #{tpu_custom_call.1} parent=11 // pred_fallthru
          _
      $region12: #{tpu_custom_call.1} parent=5 // pred_fallthru
        _
      %p153 = scmp.lt.s32.totalorder %s15, 2
      // Predicated region
      $region17: #{tpu_custom_call.1} parent=5 // pred_check
        %p154 = pneg %p153
      $region18: #{tpu_custom_call.1} parent=5 // pred_check_branch
        %156 = sbr.rel (%p154) target = $region20
      $region19: #{tpu_custom_call.1} parent=5 // pred_region
        // Predicated region
        $region21: #{tpu_custom_call.1} parent=19 // pred_check
          %p157 = pneg %p84
        $region22: #{tpu_custom_call.1} parent=19 // pred_check_branch
          %159 = sbr.rel (%p157) target = $region24
        $region23: #{tpu_custom_call.1} parent=19 // pred_region
          %s160 = sand.u32 %s74, 1
          %s161 = scalar_lea.sflag [#allocation7], %s160
          %s162 = sand.u32 %s74, 1
          %s163 = smul.addr %s162, 1024
          %s164 = scalar_lea.vmem [#allocation6], %s163
          %s165 = smul.u32 64, %s24
          %s166 = smul.u32 4, %s23
          %168 = vsyncadd %s161, 0
          %s169 = smul.addr %s165, 8
          %s170 = sadd.s32 %s166, %s169
          %s171 = smul.addr %s170, 4
          %s172 = scalar_lea.hbm %s1, %s171
          %s173 = sshll.u32 %s172, 4
          %s174 = int_to_ptr.hbm [resolvable:$true] %s173
          %s175 = sshll.u32 %s164, 4
          %s176 = int_to_ptr.vmem [resolvable:$true] %s175
          %181 = dma.hbm_to_vmem [thread:$0]  %s174, 16384, %s176, %s161, 512, 256, 16
        $region24: #{tpu_custom_call.1} parent=19 // pred_fallthru
          _
      $region20: #{tpu_custom_call.1} parent=5 // pred_fallthru
        _
      %p182 = scmp.le.s32.totalorder 1, %s15
      %p183 = scmp.lt.s32.totalorder %s15, 3
      %p184 = pnand %p182, %p183
      %p185 = pneg %p184
      // Predicated region
      $region25: #{tpu_custom_call.1} parent=5 // pred_check
        _
      $region26: #{tpu_custom_call.1} parent=5 // pred_check_branch
        %187 = sbr.rel (%p184) target = $region28
      $region27: #{tpu_custom_call.1} parent=5 // pred_region
        %s188 = ssub.s32 %s15, 1
        // Predicated region
        $region29: #{tpu_custom_call.1} parent=27 // pred_check
          %p189 = pneg %p62
        $region30: #{tpu_custom_call.1} parent=27 // pred_check_branch
          %191 = sbr.rel (%p189) target = $region32
        $region31: #{tpu_custom_call.1} parent=27 // pred_region
          %193 = dma.done [#allocation4], 512
        $region32: #{tpu_custom_call.1} parent=27 // pred_fallthru
          _
        %s194 = sand.u32 %s77, 1
        %s195 = scalar_lea.sflag [#allocation7], %s194
        %s196 = sand.u32 %s77, 1
        %s197 = smul.addr %s196, 1024
        %s198 = scalar_lea.vmem [#allocation6], %s197
        // Predicated region
        $region33: #{tpu_custom_call.1} parent=27 // pred_check
          %p199 = pneg %p90
        $region34: #{tpu_custom_call.1} parent=27 // pred_check_branch
          %201 = sbr.rel (%p199) target = $region36
        $region35: #{tpu_custom_call.1} parent=27 // pred_region
          %203 = dma.done %s195, 16384
        $region36: #{tpu_custom_call.1} parent=27 // pred_fallthru
          _
        %p204 = pneg %p62
        %p205 = pneg %p59
        %s206 = sand.u32 %s77, 1
        %s207 = scalar_lea.sflag [#allocation7], %s206
        %s208 = sand.u32 %s77, 1
        %s209 = smul.addr %s208, 1024
        %s210 = scalar_lea.vmem [#allocation6], %s209
        %p211 = pneg %p90
        %p212 = pneg %p87
        %p213 = pneg %p118
        %p214 = pneg %p115
        %s215 = sand.u32 %s105, 1
        %s216 = scalar_lea.sflag [#allocation5], %s215
        %s217 = sand.u32 %s105, 1
        %s218 = smul.addr %s217, 32
        %s219 = scalar_lea.vmem [#allocation8], %s218
        %s220 = smul.u32 2, %s25
        %s221 = smul.u32 4, %s27
        %s222 = smul.u32 64, %s27
        %s223 = smul.u32 4, %s26
        %s224 = smul.u32 2, %s25
        %s225 = smul.u32 4, %s26
        %p226 = scmp.eq.s32.totalorder %s27, 0
        // Predicated region
        $region37: #{tpu_custom_call.1} parent=27 // pred_check
          %p227 = pneg %p226
        $region38: #{tpu_custom_call.1} parent=27 // pred_check_branch
          %229 = sbr.rel (%p227) target = $region40
        $region39: #{tpu_custom_call.1} parent=27 // pred_region
          %230 = vst [vmem:[#allocation2] sm:$0xff] 0.0
          %231 = vst [vmem:[#allocation2 + $0x8] sm:$0xff] 0.0
          %232 = vst [vmem:[#allocation2 + $0x10] sm:$0xff] 0.0
          %233 = vst [vmem:[#allocation2 + $0x18] sm:$0xff] 0.0
          %234 = vst [vmem:[#allocation2 + $0x20] sm:$0xff] 0.0
          %235 = vst [vmem:[#allocation2 + $0x28] sm:$0xff] 0.0
          %236 = vst [vmem:[#allocation2 + $0x30] sm:$0xff] 0.0
          %237 = vst [vmem:[#allocation2 + $0x38] sm:$0xff] 0.0
        $region40: #{tpu_custom_call.1} parent=27 // pred_fallthru
          _
        %v238 = vld [vmem:[#allocation2] sm:$0xff]
        %v239 = vld [vmem:[#allocation2 + $0x8] sm:$0xff]
        %v240 = vld [vmem:[#allocation2 + $0x10] sm:$0xff]
        %v241 = vld [vmem:[#allocation2 + $0x18] sm:$0xff]
        %v242 = vld [vmem:[#allocation2 + $0x20] sm:$0xff]
        %v243 = vld [vmem:[#allocation2 + $0x28] sm:$0xff]
        %v244 = vld [vmem:[#allocation2 + $0x30] sm:$0xff]
        %v245 = vld [vmem:[#allocation2 + $0x38] sm:$0xff]
        %v246 = vld [vmem:[#allocation3] sm:$0xff]
        %v247 = vld [vmem:[#allocation3 + $0x8] sm:$0xff]
        %v248 = vld [vmem:[#allocation3 + $0x10] sm:$0xff]
        %v249 = vld [vmem:[#allocation3 + $0x18] sm:$0xff]
        %v250 = vld [vmem:[%s198] sm:$0xff]
        %v251 = vld [vmem:[%s198 + $0x8] sm:$0xff]
        %v252 = vld [vmem:[%s198 + $0x10] sm:$0xff]
        %v253 = vld [vmem:[%s198 + $0x18] sm:$0xff]
        %v254 = vld [vmem:[%s198 + $0x20] sm:$0xff]
        %v255 = vld [vmem:[%s198 + $0x28] sm:$0xff]
        %v256 = vld [vmem:[%s198 + $0x30] sm:$0xff]
        %v257 = vld [vmem:[%s198 + $0x38] sm:$0xff]
        %v258 = vld [vmem:[%s198 + $0x40] sm:$0xff]
        %v259 = vld [vmem:[%s198 + $0x48] sm:$0xff]
        %v260 = vld [vmem:[%s198 + $0x50] sm:$0xff]
        %v261 = vld [vmem:[%s198 + $0x58] sm:$0xff]
        %v262 = vld [vmem:[%s198 + $0x60] sm:$0xff]
        %v263 = vld [vmem:[%s198 + $0x68] sm:$0xff]
        %v264 = vld [vmem:[%s198 + $0x70] sm:$0xff]
        %v265 = vld [vmem:[%s198 + $0x78] sm:$0xff]
        %v266 = vld [vmem:[%s198 + $0x80] sm:$0xff]
        %v267 = vld [vmem:[%s198 + $0x88] sm:$0xff]
        %v268 = vld [vmem:[%s198 + $0x90] sm:$0xff]
        %v269 = vld [vmem:[%s198 + $0x98] sm:$0xff]
        %v270 = vld [vmem:[%s198 + $0xa0] sm:$0xff]
        %v271 = vld [vmem:[%s198 + $0xa8] sm:$0xff]
        %v272 = vld [vmem:[%s198 + $0xb0] sm:$0xff]
        %v273 = vld [vmem:[%s198 + $0xb8] sm:$0xff]
        %v274 = vld [vmem:[%s198 + $0xc0] sm:$0xff]
        %v275 = vld [vmem:[%s198 + $0xc8] sm:$0xff]
        %v276 = vld [vmem:[%s198 + $0xd0] sm:$0xff]
        %v277 = vld [vmem:[%s198 + $0xd8] sm:$0xff]
        %v278 = vld [vmem:[%s198 + $0xe0] sm:$0xff]
        %v279 = vld [vmem:[%s198 + $0xe8] sm:$0xff]
        %v280 = vld [vmem:[%s198 + $0xf0] sm:$0xff]
        %v281 = vld [vmem:[%s198 + $0xf8] sm:$0xff]
        %v282 = vld [vmem:[%s198 + $0x100] sm:$0xff]
        %v283 = vld [vmem:[%s198 + $0x108] sm:$0xff]
        %v284 = vld [vmem:[%s198 + $0x110] sm:$0xff]
        %v285 = vld [vmem:[%s198 + $0x118] sm:$0xff]
        %v286 = vld [vmem:[%s198 + $0x120] sm:$0xff]
        %v287 = vld [vmem:[%s198 + $0x128] sm:$0xff]
        %v288 = vld [vmem:[%s198 + $0x130] sm:$0xff]
        %v289 = vld [vmem:[%s198 + $0x138] sm:$0xff]
        %v290 = vld [vmem:[%s198 + $0x140] sm:$0xff]
        %v291 = vld [vmem:[%s198 + $0x148] sm:$0xff]
        %v292 = vld [vmem:[%s198 + $0x150] sm:$0xff]
        %v293 = vld [vmem:[%s198 + $0x158] sm:$0xff]
        %v294 = vld [vmem:[%s198 + $0x160] sm:$0xff]
        %v295 = vld [vmem:[%s198 + $0x168] sm:$0xff]
        %v296 = vld [vmem:[%s198 + $0x170] sm:$0xff]
        %v297 = vld [vmem:[%s198 + $0x178] sm:$0xff]
        %v298 = vld [vmem:[%s198 + $0x180] sm:$0xff]
        %v299 = vld [vmem:[%s198 + $0x188] sm:$0xff]
        %v300 = vld [vmem:[%s198 + $0x190] sm:$0xff]
        %v301 = vld [vmem:[%s198 + $0x198] sm:$0xff]
        %v302 = vld [vmem:[%s198 + $0x1a0] sm:$0xff]
        %v303 = vld [vmem:[%s198 + $0x1a8] sm:$0xff]
        %v304 = vld [vmem:[%s198 + $0x1b0] sm:$0xff]
        %v305 = vld [vmem:[%s198 + $0x1b8] sm:$0xff]
        %v306 = vld [vmem:[%s198 + $0x1c0] sm:$0xff]
        %v307 = vld [vmem:[%s198 + $0x1c8] sm:$0xff]
        %v308 = vld [vmem:[%s198 + $0x1d0] sm:$0xff]
        %v309 = vld [vmem:[%s198 + $0x1d8] sm:$0xff]
        %v310 = vld [vmem:[%s198 + $0x1e0] sm:$0xff]
        %v311 = vld [vmem:[%s198 + $0x1e8] sm:$0xff]
        %v312 = vld [vmem:[%s198 + $0x1f0] sm:$0xff]
        %v313 = vld [vmem:[%s198 + $0x1f8] sm:$0xff]
        %v314 = vld [vmem:[%s198 + $0x200] sm:$0xff]
        %v315 = vld [vmem:[%s198 + $0x208] sm:$0xff]
        %v316 = vld [vmem:[%s198 + $0x210] sm:$0xff]
        %v317 = vld [vmem:[%s198 + $0x218] sm:$0xff]
        %v318 = vld [vmem:[%s198 + $0x220] sm:$0xff]
        %v319 = vld [vmem:[%s198 + $0x228] sm:$0xff]
        %v320 = vld [vmem:[%s198 + $0x230] sm:$0xff]
        %v321 = vld [vmem:[%s198 + $0x238] sm:$0xff]
        %v322 = vld [vmem:[%s198 + $0x240] sm:$0xff]
        %v323 = vld [vmem:[%s198 + $0x248] sm:$0xff]
        %v324 = vld [vmem:[%s198 + $0x250] sm:$0xff]
        %v325 = vld [vmem:[%s198 + $0x258] sm:$0xff]
        %v326 = vld [vmem:[%s198 + $0x260] sm:$0xff]
        %v327 = vld [vmem:[%s198 + $0x268] sm:$0xff]
        %v328 = vld [vmem:[%s198 + $0x270] sm:$0xff]
        %v329 = vld [vmem:[%s198 + $0x278] sm:$0xff]
        %v330 = vld [vmem:[%s198 + $0x280] sm:$0xff]
        %v331 = vld [vmem:[%s198 + $0x288] sm:$0xff]
        %v332 = vld [vmem:[%s198 + $0x290] sm:$0xff]
        %v333 = vld [vmem:[%s198 + $0x298] sm:$0xff]
        %v334 = vld [vmem:[%s198 + $0x2a0] sm:$0xff]
        %v335 = vld [vmem:[%s198 + $0x2a8] sm:$0xff]
        %v336 = vld [vmem:[%s198 + $0x2b0] sm:$0xff]
        %v337 = vld [vmem:[%s198 + $0x2b8] sm:$0xff]
        %v338 = vld [vmem:[%s198 + $0x2c0] sm:$0xff]
        %v339 = vld [vmem:[%s198 + $0x2c8] sm:$0xff]
        %v340 = vld [vmem:[%s198 + $0x2d0] sm:$0xff]
        %v341 = vld [vmem:[%s198 + $0x2d8] sm:$0xff]
        %v342 = vld [vmem:[%s198 + $0x2e0] sm:$0xff]
        %v343 = vld [vmem:[%s198 + $0x2e8] sm:$0xff]
        %v344 = vld [vmem:[%s198 + $0x2f0] sm:$0xff]
        %v345 = vld [vmem:[%s198 + $0x2f8] sm:$0xff]
        %v346 = vld [vmem:[%s198 + $0x300] sm:$0xff]
        %v347 = vld [vmem:[%s198 + $0x308] sm:$0xff]
        %v348 = vld [vmem:[%s198 + $0x310] sm:$0xff]
        %v349 = vld [vmem:[%s198 + $0x318] sm:$0xff]
        %v350 = vld [vmem:[%s198 + $0x320] sm:$0xff]
        %v351 = vld [vmem:[%s198 + $0x328] sm:$0xff]
        %v352 = vld [vmem:[%s198 + $0x330] sm:$0xff]
        %v353 = vld [vmem:[%s198 + $0x338] sm:$0xff]
        %v354 = vld [vmem:[%s198 + $0x340] sm:$0xff]
        %v355 = vld [vmem:[%s198 + $0x348] sm:$0xff]
        %v356 = vld [vmem:[%s198 + $0x350] sm:$0xff]
        %v357 = vld [vmem:[%s198 + $0x358] sm:$0xff]
        %v358 = vld [vmem:[%s198 + $0x360] sm:$0xff]
        %v359 = vld [vmem:[%s198 + $0x368] sm:$0xff]
        %v360 = vld [vmem:[%s198 + $0x370] sm:$0xff]
        %v361 = vld [vmem:[%s198 + $0x378] sm:$0xff]
        %v362 = vld [vmem:[%s198 + $0x380] sm:$0xff]
        %v363 = vld [vmem:[%s198 + $0x388] sm:$0xff]
        %v364 = vld [vmem:[%s198 + $0x390] sm:$0xff]
        %v365 = vld [vmem:[%s198 + $0x398] sm:$0xff]
        %v366 = vld [vmem:[%s198 + $0x3a0] sm:$0xff]
        %v367 = vld [vmem:[%s198 + $0x3a8] sm:$0xff]
        %v368 = vld [vmem:[%s198 + $0x3b0] sm:$0xff]
        %v369 = vld [vmem:[%s198 + $0x3b8] sm:$0xff]
        %v370 = vld [vmem:[%s198 + $0x3c0] sm:$0xff]
        %v371 = vld [vmem:[%s198 + $0x3c8] sm:$0xff]
        %v372 = vld [vmem:[%s198 + $0x3d0] sm:$0xff]
        %v373 = vld [vmem:[%s198 + $0x3d8] sm:$0xff]
        %v374 = vld [vmem:[%s198 + $0x3e0] sm:$0xff]
        %v375 = vld [vmem:[%s198 + $0x3e8] sm:$0xff]
        %v376 = vld [vmem:[%s198 + $0x3f0] sm:$0xff]
        %v377 = vld [vmem:[%s198 + $0x3f8] sm:$0xff]
        %v382 = vunpack.c.l.b16 %v246
        %v383 = vunpack.c.h.b16 %v246
        %v384 = vunpack.c.l.b16 %v247
        %v385 = vunpack.c.h.b16 %v247
        %v386 = vunpack.c.l.b16 %v248
        %v387 = vunpack.c.h.b16 %v248
        %v388 = vunpack.c.l.b16 %v249
        %v389 = vunpack.c.h.b16 %v249
        %v390 = vpack.c.b16 %v386, %v382
        %v391 = vpack.c.b16 %v387, %v383
        %v392 = vpack.c.b16 %v388, %v384
        %v393 = vpack.c.b16 %v389, %v385
        %v526 = vunpack.c.l.b16 %v250
        %v527 = vunpack.c.h.b16 %v250
        %v528 = vunpack.c.l.b16 %v251
        %v529 = vunpack.c.h.b16 %v251
        %v530 = vunpack.c.l.b16 %v252
        %v531 = vunpack.c.h.b16 %v252
        %v532 = vunpack.c.l.b16 %v253
        %v533 = vunpack.c.h.b16 %v253
        %v534 = vunpack.c.l.b16 %v254
        %v535 = vunpack.c.h.b16 %v254
        %v536 = vunpack.c.l.b16 %v255
        %v537 = vunpack.c.h.b16 %v255
        %v538 = vunpack.c.l.b16 %v256
        %v539 = vunpack.c.h.b16 %v256
        %v540 = vunpack.c.l.b16 %v257
        %v541 = vunpack.c.h.b16 %v257
        %v542 = vunpack.c.l.b16 %v258
        %v543 = vunpack.c.h.b16 %v258
        %v544 = vunpack.c.l.b16 %v259
        %v545 = vunpack.c.h.b16 %v259
        %v546 = vunpack.c.l.b16 %v260
        %v547 = vunpack.c.h.b16 %v260
        %v548 = vunpack.c.l.b16 %v261
        %v549 = vunpack.c.h.b16 %v261
        %v550 = vunpack.c.l.b16 %v262
        %v551 = vunpack.c.h.b16 %v262
        %v552 = vunpack.c.l.b16 %v263
        %v553 = vunpack.c.h.b16 %v263
        %v554 = vunpack.c.l.b16 %v264
        %v555 = vunpack.c.h.b16 %v264
        %v556 = vunpack.c.l.b16 %v265
        %v557 = vunpack.c.h.b16 %v265
        %v558 = vunpack.c.l.b16 %v266
        %v559 = vunpack.c.h.b16 %v266
        %v560 = vunpack.c.l.b16 %v267
        %v561 = vunpack.c.h.b16 %v267
        %v562 = vunpack.c.l.b16 %v268
        %v563 = vunpack.c.h.b16 %v268
        %v564 = vunpack.c.l.b16 %v269
        %v565 = vunpack.c.h.b16 %v269
        %v566 = vunpack.c.l.b16 %v270
        %v567 = vunpack.c.h.b16 %v270
        %v568 = vunpack.c.l.b16 %v271
        %v569 = vunpack.c.h.b16 %v271
        %v570 = vunpack.c.l.b16 %v272
        %v571 = vunpack.c.h.b16 %v272
        %v572 = vunpack.c.l.b16 %v273
        %v573 = vunpack.c.h.b16 %v273
        %v574 = vunpack.c.l.b16 %v274
        %v575 = vunpack.c.h.b16 %v274
        %v576 = vunpack.c.l.b16 %v275
        %v577 = vunpack.c.h.b16 %v275
        %v578 = vunpack.c.l.b16 %v276
        %v579 = vunpack.c.h.b16 %v276
        %v580 = vunpack.c.l.b16 %v277
        %v581 = vunpack.c.h.b16 %v277
        %v582 = vunpack.c.l.b16 %v278
        %v583 = vunpack.c.h.b16 %v278
        %v584 = vunpack.c.l.b16 %v279
        %v585 = vunpack.c.h.b16 %v279
        %v586 = vunpack.c.l.b16 %v280
        %v587 = vunpack.c.h.b16 %v280
        %v588 = vunpack.c.l.b16 %v281
        %v589 = vunpack.c.h.b16 %v281
        %v590 = vunpack.c.l.b16 %v282
        %v591 = vunpack.c.h.b16 %v282
        %v592 = vunpack.c.l.b16 %v283
        %v593 = vunpack.c.h.b16 %v283
        %v594 = vunpack.c.l.b16 %v284
        %v595 = vunpack.c.h.b16 %v284
        %v596 = vunpack.c.l.b16 %v285
        %v597 = vunpack.c.h.b16 %v285
        %v598 = vunpack.c.l.b16 %v286
        %v599 = vunpack.c.h.b16 %v286
        %v600 = vunpack.c.l.b16 %v287
        %v601 = vunpack.c.h.b16 %v287
        %v602 = vunpack.c.l.b16 %v288
        %v603 = vunpack.c.h.b16 %v288
        %v604 = vunpack.c.l.b16 %v289
        %v605 = vunpack.c.h.b16 %v289
        %v606 = vunpack.c.l.b16 %v290
        %v607 = vunpack.c.h.b16 %v290
        %v608 = vunpack.c.l.b16 %v291
        %v609 = vunpack.c.h.b16 %v291
        %v610 = vunpack.c.l.b16 %v292
        %v611 = vunpack.c.h.b16 %v292
        %v612 = vunpack.c.l.b16 %v293
        %v613 = vunpack.c.h.b16 %v293
        %v614 = vunpack.c.l.b16 %v294
        %v615 = vunpack.c.h.b16 %v294
        %v616 = vunpack.c.l.b16 %v295
        %v617 = vunpack.c.h.b16 %v295
        %v618 = vunpack.c.l.b16 %v296
        %v619 = vunpack.c.h.b16 %v296
        %v620 = vunpack.c.l.b16 %v297
        %v621 = vunpack.c.h.b16 %v297
        %v622 = vunpack.c.l.b16 %v298
        %v623 = vunpack.c.h.b16 %v298
        %v624 = vunpack.c.l.b16 %v299
        %v625 = vunpack.c.h.b16 %v299
        %v626 = vunpack.c.l.b16 %v300
        %v627 = vunpack.c.h.b16 %v300
        %v628 = vunpack.c.l.b16 %v301
        %v629 = vunpack.c.h.b16 %v301
        %v630 = vunpack.c.l.b16 %v302
        %v631 = vunpack.c.h.b16 %v302
        %v632 = vunpack.c.l.b16 %v303
        %v633 = vunpack.c.h.b16 %v303
        %v634 = vunpack.c.l.b16 %v304
        %v635 = vunpack.c.h.b16 %v304
        %v636 = vunpack.c.l.b16 %v305
        %v637 = vunpack.c.h.b16 %v305
        %v638 = vunpack.c.l.b16 %v306
        %v639 = vunpack.c.h.b16 %v306
        %v640 = vunpack.c.l.b16 %v307
        %v641 = vunpack.c.h.b16 %v307
        %v642 = vunpack.c.l.b16 %v308
        %v643 = vunpack.c.h.b16 %v308
        %v644 = vunpack.c.l.b16 %v309
        %v645 = vunpack.c.h.b16 %v309
        %v646 = vunpack.c.l.b16 %v310
        %v647 = vunpack.c.h.b16 %v310
        %v648 = vunpack.c.l.b16 %v311
        %v649 = vunpack.c.h.b16 %v311
        %v650 = vunpack.c.l.b16 %v312
        %v651 = vunpack.c.h.b16 %v312
        %v652 = vunpack.c.l.b16 %v313
        %v653 = vunpack.c.h.b16 %v313
        %v654 = vunpack.c.l.b16 %v314
        %v655 = vunpack.c.h.b16 %v314
        %v656 = vunpack.c.l.b16 %v315
        %v657 = vunpack.c.h.b16 %v315
        %v658 = vunpack.c.l.b16 %v316
        %v659 = vunpack.c.h.b16 %v316
        %v660 = vunpack.c.l.b16 %v317
        %v661 = vunpack.c.h.b16 %v317
        %v662 = vunpack.c.l.b16 %v318
        %v663 = vunpack.c.h.b16 %v318
        %v664 = vunpack.c.l.b16 %v319
        %v665 = vunpack.c.h.b16 %v319
        %v666 = vunpack.c.l.b16 %v320
        %v667 = vunpack.c.h.b16 %v320
        %v668 = vunpack.c.l.b16 %v321
        %v669 = vunpack.c.h.b16 %v321
        %v670 = vunpack.c.l.b16 %v322
        %v671 = vunpack.c.h.b16 %v322
        %v672 = vunpack.c.l.b16 %v323
        %v673 = vunpack.c.h.b16 %v323
        %v674 = vunpack.c.l.b16 %v324
        %v675 = vunpack.c.h.b16 %v324
        %v676 = vunpack.c.l.b16 %v325
        %v677 = vunpack.c.h.b16 %v325
        %v678 = vunpack.c.l.b16 %v326
        %v679 = vunpack.c.h.b16 %v326
        %v680 = vunpack.c.l.b16 %v327
        %v681 = vunpack.c.h.b16 %v327
        %v682 = vunpack.c.l.b16 %v328
        %v683 = vunpack.c.h.b16 %v328
        %v684 = vunpack.c.l.b16 %v329
        %v685 = vunpack.c.h.b16 %v329
        %v686 = vunpack.c.l.b16 %v330
        %v687 = vunpack.c.h.b16 %v330
        %v688 = vunpack.c.l.b16 %v331
        %v689 = vunpack.c.h.b16 %v331
        %v690 = vunpack.c.l.b16 %v332
        %v691 = vunpack.c.h.b16 %v332
        %v692 = vunpack.c.l.b16 %v333
        %v693 = vunpack.c.h.b16 %v333
        %v694 = vunpack.c.l.b16 %v334
        %v695 = vunpack.c.h.b16 %v334
        %v696 = vunpack.c.l.b16 %v335
        %v697 = vunpack.c.h.b16 %v335
        %v698 = vunpack.c.l.b16 %v336
        %v699 = vunpack.c.h.b16 %v336
        %v700 = vunpack.c.l.b16 %v337
        %v701 = vunpack.c.h.b16 %v337
        %v702 = vunpack.c.l.b16 %v338
        %v703 = vunpack.c.h.b16 %v338
        %v704 = vunpack.c.l.b16 %v339
        %v705 = vunpack.c.h.b16 %v339
        %v706 = vunpack.c.l.b16 %v340
        %v707 = vunpack.c.h.b16 %v340
        %v708 = vunpack.c.l.b16 %v341
        %v709 = vunpack.c.h.b16 %v341
        %v710 = vunpack.c.l.b16 %v342
        %v711 = vunpack.c.h.b16 %v342
        %v712 = vunpack.c.l.b16 %v343
        %v713 = vunpack.c.h.b16 %v343
        %v714 = vunpack.c.l.b16 %v344
        %v715 = vunpack.c.h.b16 %v344
        %v716 = vunpack.c.l.b16 %v345
        %v717 = vunpack.c.h.b16 %v345
        %v718 = vunpack.c.l.b16 %v346
        %v719 = vunpack.c.h.b16 %v346
        %v720 = vunpack.c.l.b16 %v347
        %v721 = vunpack.c.h.b16 %v347
        %v722 = vunpack.c.l.b16 %v348
        %v723 = vunpack.c.h.b16 %v348
        %v724 = vunpack.c.l.b16 %v349
        %v725 = vunpack.c.h.b16 %v349
        %v726 = vunpack.c.l.b16 %v350
        %v727 = vunpack.c.h.b16 %v350
        %v728 = vunpack.c.l.b16 %v351
        %v729 = vunpack.c.h.b16 %v351
        %v730 = vunpack.c.l.b16 %v352
        %v731 = vunpack.c.h.b16 %v352
        %v732 = vunpack.c.l.b16 %v353
        %v733 = vunpack.c.h.b16 %v353
        %v734 = vunpack.c.l.b16 %v354
        %v735 = vunpack.c.h.b16 %v354
        %v736 = vunpack.c.l.b16 %v355
        %v737 = vunpack.c.h.b16 %v355
        %v738 = vunpack.c.l.b16 %v356
        %v739 = vunpack.c.h.b16 %v356
        %v740 = vunpack.c.l.b16 %v357
        %v741 = vunpack.c.h.b16 %v357
        %v742 = vunpack.c.l.b16 %v358
        %v743 = vunpack.c.h.b16 %v358
        %v744 = vunpack.c.l.b16 %v359
        %v745 = vunpack.c.h.b16 %v359
        %v746 = vunpack.c.l.b16 %v360
        %v747 = vunpack.c.h.b16 %v360
        %v748 = vunpack.c.l.b16 %v361
        %v749 = vunpack.c.h.b16 %v361
        %v750 = vunpack.c.l.b16 %v362
        %v751 = vunpack.c.h.b16 %v362
        %v752 = vunpack.c.l.b16 %v363
        %v753 = vunpack.c.h.b16 %v363
        %v754 = vunpack.c.l.b16 %v364
        %v755 = vunpack.c.h.b16 %v364
        %v756 = vunpack.c.l.b16 %v365
        %v757 = vunpack.c.h.b16 %v365
        %v758 = vunpack.c.l.b16 %v366
        %v759 = vunpack.c.h.b16 %v366
        %v760 = vunpack.c.l.b16 %v367
        %v761 = vunpack.c.h.b16 %v367
        %v762 = vunpack.c.l.b16 %v368
        %v763 = vunpack.c.h.b16 %v368
        %v764 = vunpack.c.l.b16 %v369
        %v765 = vunpack.c.h.b16 %v369
        %v766 = vunpack.c.l.b16 %v370
        %v767 = vunpack.c.h.b16 %v370
        %v768 = vunpack.c.l.b16 %v371
        %v769 = vunpack.c.h.b16 %v371
        %v770 = vunpack.c.l.b16 %v372
        %v771 = vunpack.c.h.b16 %v372
        %v772 = vunpack.c.l.b16 %v373
        %v773 = vunpack.c.h.b16 %v373
        %v774 = vunpack.c.l.b16 %v374
        %v775 = vunpack.c.h.b16 %v374
        %v776 = vunpack.c.l.b16 %v375
        %v777 = vunpack.c.h.b16 %v375
        %v778 = vunpack.c.l.b16 %v376
        %v779 = vunpack.c.h.b16 %v376
        %v780 = vunpack.c.l.b16 %v377
        %v781 = vunpack.c.h.b16 %v377
        %v782 = vpack.c.b16 %v530, %v526
        %v783 = vpack.c.b16 %v531, %v527
        %v784 = vpack.c.b16 %v532, %v528
        %v785 = vpack.c.b16 %v533, %v529
        %v786 = vpack.c.b16 %v538, %v534
        %v787 = vpack.c.b16 %v539, %v535
        %v788 = vpack.c.b16 %v540, %v536
        %v789 = vpack.c.b16 %v541, %v537
        %v790 = vpack.c.b16 %v546, %v542
        %v791 = vpack.c.b16 %v547, %v543
        %v792 = vpack.c.b16 %v548, %v544
        %v793 = vpack.c.b16 %v549, %v545
        %v794 = vpack.c.b16 %v554, %v550
        %v795 = vpack.c.b16 %v555, %v551
        %v796 = vpack.c.b16 %v556, %v552
        %v797 = vpack.c.b16 %v557, %v553
        %v798 = vpack.c.b16 %v562, %v558
        %v799 = vpack.c.b16 %v563, %v559
        %v800 = vpack.c.b16 %v564, %v560
        %v801 = vpack.c.b16 %v565, %v561
        %v802 = vpack.c.b16 %v570, %v566
        %v803 = vpack.c.b16 %v571, %v567
        %v804 = vpack.c.b16 %v572, %v568
        %v805 = vpack.c.b16 %v573, %v569
        %v806 = vpack.c.b16 %v578, %v574
        %v807 = vpack.c.b16 %v579, %v575
        %v808 = vpack.c.b16 %v580, %v576
        %v809 = vpack.c.b16 %v581, %v577
        %v810 = vpack.c.b16 %v586, %v582
        %v811 = vpack.c.b16 %v587, %v583
        %v812 = vpack.c.b16 %v588, %v584
        %v813 = vpack.c.b16 %v589, %v585
        %v814 = vpack.c.b16 %v594, %v590
        %v815 = vpack.c.b16 %v595, %v591
        %v816 = vpack.c.b16 %v596, %v592
        %v817 = vpack.c.b16 %v597, %v593
        %v818 = vpack.c.b16 %v602, %v598
        %v819 = vpack.c.b16 %v603, %v599
        %v820 = vpack.c.b16 %v604, %v600
        %v821 = vpack.c.b16 %v605, %v601
        %v822 = vpack.c.b16 %v610, %v606
        %v823 = vpack.c.b16 %v611, %v607
        %v824 = vpack.c.b16 %v612, %v608
        %v825 = vpack.c.b16 %v613, %v609
        %v826 = vpack.c.b16 %v618, %v614
        %v827 = vpack.c.b16 %v619, %v615
        %v828 = vpack.c.b16 %v620, %v616
        %v829 = vpack.c.b16 %v621, %v617
        %v830 = vpack.c.b16 %v626, %v622
        %v831 = vpack.c.b16 %v627, %v623
        %v832 = vpack.c.b16 %v628, %v624
        %v833 = vpack.c.b16 %v629, %v625
        %v834 = vpack.c.b16 %v634, %v630
        %v835 = vpack.c.b16 %v635, %v631
        %v836 = vpack.c.b16 %v636, %v632
        %v837 = vpack.c.b16 %v637, %v633
        %v838 = vpack.c.b16 %v642, %v638
        %v839 = vpack.c.b16 %v643, %v639
        %v840 = vpack.c.b16 %v644, %v640
        %v841 = vpack.c.b16 %v645, %v641
        %v842 = vpack.c.b16 %v650, %v646
        %v843 = vpack.c.b16 %v651, %v647
        %v844 = vpack.c.b16 %v652, %v648
        %v845 = vpack.c.b16 %v653, %v649
        %v846 = vpack.c.b16 %v658, %v654
        %v847 = vpack.c.b16 %v659, %v655
        %v848 = vpack.c.b16 %v660, %v656
        %v849 = vpack.c.b16 %v661, %v657
        %v850 = vpack.c.b16 %v666, %v662
        %v851 = vpack.c.b16 %v667, %v663
        %v852 = vpack.c.b16 %v668, %v664
        %v853 = vpack.c.b16 %v669, %v665
        %v854 = vpack.c.b16 %v674, %v670
        %v855 = vpack.c.b16 %v675, %v671
        %v856 = vpack.c.b16 %v676, %v672
        %v857 = vpack.c.b16 %v677, %v673
        %v858 = vpack.c.b16 %v682, %v678
        %v859 = vpack.c.b16 %v683, %v679
        %v860 = vpack.c.b16 %v684, %v680
        %v861 = vpack.c.b16 %v685, %v681
        %v862 = vpack.c.b16 %v690, %v686
        %v863 = vpack.c.b16 %v691, %v687
        %v864 = vpack.c.b16 %v692, %v688
        %v865 = vpack.c.b16 %v693, %v689
        %v866 = vpack.c.b16 %v698, %v694
        %v867 = vpack.c.b16 %v699, %v695
        %v868 = vpack.c.b16 %v700, %v696
        %v869 = vpack.c.b16 %v701, %v697
        %v870 = vpack.c.b16 %v706, %v702
        %v871 = vpack.c.b16 %v707, %v703
        %v872 = vpack.c.b16 %v708, %v704
        %v873 = vpack.c.b16 %v709, %v705
        %v874 = vpack.c.b16 %v714, %v710
        %v875 = vpack.c.b16 %v715, %v711
        %v876 = vpack.c.b16 %v716, %v712
        %v877 = vpack.c.b16 %v717, %v713
        %v878 = vpack.c.b16 %v722, %v718
        %v879 = vpack.c.b16 %v723, %v719
        %v880 = vpack.c.b16 %v724, %v720
        %v881 = vpack.c.b16 %v725, %v721
        %v882 = vpack.c.b16 %v730, %v726
        %v883 = vpack.c.b16 %v731, %v727
        %v884 = vpack.c.b16 %v732, %v728
        %v885 = vpack.c.b16 %v733, %v729
        %v886 = vpack.c.b16 %v738, %v734
        %v887 = vpack.c.b16 %v739, %v735
        %v888 = vpack.c.b16 %v740, %v736
        %v889 = vpack.c.b16 %v741, %v737
        %v890 = vpack.c.b16 %v746, %v742
        %v891 = vpack.c.b16 %v747, %v743
        %v892 = vpack.c.b16 %v748, %v744
        %v893 = vpack.c.b16 %v749, %v745
        %v894 = vpack.c.b16 %v754, %v750
        %v895 = vpack.c.b16 %v755, %v751
        %v896 = vpack.c.b16 %v756, %v752
        %v897 = vpack.c.b16 %v757, %v753
        %v898 = vpack.c.b16 %v762, %v758
        %v899 = vpack.c.b16 %v763, %v759
        %v900 = vpack.c.b16 %v764, %v760
        %v901 = vpack.c.b16 %v765, %v761
        %v902 = vpack.c.b16 %v770, %v766
        %v903 = vpack.c.b16 %v771, %v767
        %v904 = vpack.c.b16 %v772, %v768
        %v905 = vpack.c.b16 %v773, %v769
        %v906 = vpack.c.b16 %v778, %v774
        %v907 = vpack.c.b16 %v779, %v775
        %v908 = vpack.c.b16 %v780, %v776
        %v909 = vpack.c.b16 %v781, %v777
        %1038 = vmatpush.bf16.msra.mxu0 %v810
        %1039 = vmatpush.bf16.msra.mxu0 %v806
        %1040 = vmatpush.bf16.msra.mxu0 %v802
        %1041 = vmatpush.bf16.msra.mxu0 %v798
        %1042 = vmatpush.bf16.msra.mxu0 %v794
        %1043 = vmatpush.bf16.msra.mxu0 %v790
        %1044 = vmatpush.bf16.msra.mxu0 %v786
        %1045 = vmatpush.bf16.msra.mxu0 %v782
        %1046 = vmatmul.bf16.gmra.mxu0 %v390
        %v1047 = vpop.f32.mrf.mxu0
        %v1048 = vadd.f32 0.0, %v1047
        %v1049 = vpop.f32.mrf.mxu0
        %v1050 = vadd.f32 0.0, %v1049
        %1051 = vdwg.mxu0
        %1052 = vmatpush.bf16.msra.mxu0 %v842
        %1053 = vmatpush.bf16.msra.mxu0 %v838
        %1054 = vmatpush.bf16.msra.mxu0 %v834
        %1055 = vmatpush.bf16.msra.mxu0 %v830
        %1056 = vmatpush.bf16.msra.mxu0 %v826
        %1057 = vmatpush.bf16.msra.mxu0 %v822
        %1058 = vmatpush.bf16.msra.mxu0 %v818
        %1059 = vmatpush.bf16.msra.mxu0 %v814
        %1060 = vmatmul.bf16.gmra.mxu0 %v391
        %v1061 = vpop.f32.mrf.mxu0
        %v1062 = vadd.f32 %v1048, %v1061
        %v1063 = vpop.f32.mrf.mxu0
        %v1064 = vadd.f32 %v1050, %v1063
        %1065 = vdwg.mxu0
        %1066 = vmatpush.bf16.msra.mxu0 %v874
        %1067 = vmatpush.bf16.msra.mxu0 %v870
        %1068 = vmatpush.bf16.msra.mxu0 %v866
        %1069 = vmatpush.bf16.msra.mxu0 %v862
        %1070 = vmatpush.bf16.msra.mxu0 %v858
        %1071 = vmatpush.bf16.msra.mxu0 %v854
        %1072 = vmatpush.bf16.msra.mxu0 %v850
        %1073 = vmatpush.bf16.msra.mxu0 %v846
        %1074 = vmatmul.bf16.gmra.mxu0 %v392
        %v1075 = vpop.f32.mrf.mxu0
        %v1076 = vadd.f32 %v1062, %v1075
        %v1077 = vpop.f32.mrf.mxu0
        %v1078 = vadd.f32 %v1064, %v1077
        %1079 = vdwg.mxu0
        %1080 = vmatpush.bf16.msra.mxu0 %v906
        %1081 = vmatpush.bf16.msra.mxu0 %v902
        %1082 = vmatpush.bf16.msra.mxu0 %v898
        %1083 = vmatpush.bf16.msra.mxu0 %v894
        %1084 = vmatpush.bf16.msra.mxu0 %v890
        %1085 = vmatpush.bf16.msra.mxu0 %v886
        %1086 = vmatpush.bf16.msra.mxu0 %v882
        %1087 = vmatpush.bf16.msra.mxu0 %v878
        %1088 = vmatmul.bf16.gmra.mxu0 %v393
        %v1089 = vpop.f32.mrf.mxu0
        %v1090 = vadd.f32 %v1076, %v1089
        %v1091 = vpop.f32.mrf.mxu0
        %v1092 = vadd.f32 %v1078, %v1091
        %1093 = vdwg.mxu0
        %1094 = vmatpush.bf16.msra.mxu0 %v811
        %1095 = vmatpush.bf16.msra.mxu0 %v807
        %1096 = vmatpush.bf16.msra.mxu0 %v803
        %1097 = vmatpush.bf16.msra.mxu0 %v799
        %1098 = vmatpush.bf16.msra.mxu0 %v795
        %1099 = vmatpush.bf16.msra.mxu0 %v791
        %1100 = vmatpush.bf16.msra.mxu0 %v787
        %1101 = vmatpush.bf16.msra.mxu0 %v783
        %1102 = vmatmul.bf16.gmra.mxu0 %v390
        %v1103 = vpop.f32.mrf.mxu0
        %v1104 = vadd.f32 0.0, %v1103
        %v1105 = vpop.f32.mrf.mxu0
        %v1106 = vadd.f32 0.0, %v1105
        %1107 = vdwg.mxu0
        %1108 = vmatpush.bf16.msra.mxu0 %v843
        %1109 = vmatpush.bf16.msra.mxu0 %v839
        %1110 = vmatpush.bf16.msra.mxu0 %v835
        %1111 = vmatpush.bf16.msra.mxu0 %v831
        %1112 = vmatpush.bf16.msra.mxu0 %v827
        %1113 = vmatpush.bf16.msra.mxu0 %v823
        %1114 = vmatpush.bf16.msra.mxu0 %v819
        %1115 = vmatpush.bf16.msra.mxu0 %v815
        %1116 = vmatmul.bf16.gmra.mxu0 %v391
        %v1117 = vpop.f32.mrf.mxu0
        %v1118 = vadd.f32 %v1104, %v1117
        %v1119 = vpop.f32.mrf.mxu0
        %v1120 = vadd.f32 %v1106, %v1119
        %1121 = vdwg.mxu0
        %1122 = vmatpush.bf16.msra.mxu0 %v875
        %1123 = vmatpush.bf16.msra.mxu0 %v871
        %1124 = vmatpush.bf16.msra.mxu0 %v867
        %1125 = vmatpush.bf16.msra.mxu0 %v863
        %1126 = vmatpush.bf16.msra.mxu0 %v859
        %1127 = vmatpush.bf16.msra.mxu0 %v855
        %1128 = vmatpush.bf16.msra.mxu0 %v851
        %1129 = vmatpush.bf16.msra.mxu0 %v847
        %1130 = vmatmul.bf16.gmra.mxu0 %v392
        %v1131 = vpop.f32.mrf.mxu0
        %v1132 = vadd.f32 %v1118, %v1131
        %v1133 = vpop.f32.mrf.mxu0
        %v1134 = vadd.f32 %v1120, %v1133
        %1135 = vdwg.mxu0
        %1136 = vmatpush.bf16.msra.mxu0 %v907
        %1137 = vmatpush.bf16.msra.mxu0 %v903
        %1138 = vmatpush.bf16.msra.mxu0 %v899
        %1139 = vmatpush.bf16.msra.mxu0 %v895
        %1140 = vmatpush.bf16.msra.mxu0 %v891
        %1141 = vmatpush.bf16.msra.mxu0 %v887
        %1142 = vmatpush.bf16.msra.mxu0 %v883
        %1143 = vmatpush.bf16.msra.mxu0 %v879
        %1144 = vmatmul.bf16.gmra.mxu0 %v393
        %v1145 = vpop.f32.mrf.mxu0
        %v1146 = vadd.f32 %v1132, %v1145
        %v1147 = vpop.f32.mrf.mxu0
        %v1148 = vadd.f32 %v1134, %v1147
        %1149 = vdwg.mxu0
        %1150 = vmatpush.bf16.msra.mxu0 %v812
        %1151 = vmatpush.bf16.msra.mxu0 %v808
        %1152 = vmatpush.bf16.msra.mxu0 %v804
        %1153 = vmatpush.bf16.msra.mxu0 %v800
        %1154 = vmatpush.bf16.msra.mxu0 %v796
        %1155 = vmatpush.bf16.msra.mxu0 %v792
        %1156 = vmatpush.bf16.msra.mxu0 %v788
        %1157 = vmatpush.bf16.msra.mxu0 %v784
        %1158 = vmatmul.bf16.gmra.mxu0 %v390
        %v1159 = vpop.f32.mrf.mxu0
        %v1160 = vadd.f32 0.0, %v1159
        %v1161 = vpop.f32.mrf.mxu0
        %v1162 = vadd.f32 0.0, %v1161
        %1163 = vdwg.mxu0
        %1164 = vmatpush.bf16.msra.mxu0 %v844
        %1165 = vmatpush.bf16.msra.mxu0 %v840
        %1166 = vmatpush.bf16.msra.mxu0 %v836
        %1167 = vmatpush.bf16.msra.mxu0 %v832
        %1168 = vmatpush.bf16.msra.mxu0 %v828
        %1169 = vmatpush.bf16.msra.mxu0 %v824
        %1170 = vmatpush.bf16.msra.mxu0 %v820
        %1171 = vmatpush.bf16.msra.mxu0 %v816
        %1172 = vmatmul.bf16.gmra.mxu0 %v391
        %v1173 = vpop.f32.mrf.mxu0
        %v1174 = vadd.f32 %v1160, %v1173
        %v1175 = vpop.f32.mrf.mxu0
        %v1176 = vadd.f32 %v1162, %v1175
        %1177 = vdwg.mxu0
        %1178 = vmatpush.bf16.msra.mxu0 %v876
        %1179 = vmatpush.bf16.msra.mxu0 %v872
        %1180 = vmatpush.bf16.msra.mxu0 %v868
        %1181 = vmatpush.bf16.msra.mxu0 %v864
        %1182 = vmatpush.bf16.msra.mxu0 %v860
        %1183 = vmatpush.bf16.msra.mxu0 %v856
        %1184 = vmatpush.bf16.msra.mxu0 %v852
        %1185 = vmatpush.bf16.msra.mxu0 %v848
        %1186 = vmatmul.bf16.gmra.mxu0 %v392
        %v1187 = vpop.f32.mrf.mxu0
        %v1188 = vadd.f32 %v1174, %v1187
        %v1189 = vpop.f32.mrf.mxu0
        %v1190 = vadd.f32 %v1176, %v1189
        %1191 = vdwg.mxu0
        %1192 = vmatpush.bf16.msra.mxu0 %v908
        %1193 = vmatpush.bf16.msra.mxu0 %v904
        %1194 = vmatpush.bf16.msra.mxu0 %v900
        %1195 = vmatpush.bf16.msra.mxu0 %v896
        %1196 = vmatpush.bf16.msra.mxu0 %v892
        %1197 = vmatpush.bf16.msra.mxu0 %v888
        %1198 = vmatpush.bf16.msra.mxu0 %v884
        %1199 = vmatpush.bf16.msra.mxu0 %v880
        %1200 = vmatmul.bf16.gmra.mxu0 %v393
        %v1201 = vpop.f32.mrf.mxu0
        %v1202 = vadd.f32 %v1188, %v1201
        %v1203 = vpop.f32.mrf.mxu0
        %v1204 = vadd.f32 %v1190, %v1203
        %1205 = vdwg.mxu0
        %1206 = vmatpush.bf16.msra.mxu0 %v813
        %1207 = vmatpush.bf16.msra.mxu0 %v809
        %1208 = vmatpush.bf16.msra.mxu0 %v805
        %1209 = vmatpush.bf16.msra.mxu0 %v801
        %1210 = vmatpush.bf16.msra.mxu0 %v797
        %1211 = vmatpush.bf16.msra.mxu0 %v793
        %1212 = vmatpush.bf16.msra.mxu0 %v789
        %1213 = vmatpush.bf16.msra.mxu0 %v785
        %1214 = vmatmul.bf16.gmra.mxu0 %v390
        %v1215 = vpop.f32.mrf.mxu0
        %v1216 = vadd.f32 0.0, %v1215
        %v1217 = vpop.f32.mrf.mxu0
        %v1218 = vadd.f32 0.0, %v1217
        %1219 = vdwg.mxu0
        %1220 = vmatpush.bf16.msra.mxu0 %v845
        %1221 = vmatpush.bf16.msra.mxu0 %v841
        %1222 = vmatpush.bf16.msra.mxu0 %v837
        %1223 = vmatpush.bf16.msra.mxu0 %v833
        %1224 = vmatpush.bf16.msra.mxu0 %v829
        %1225 = vmatpush.bf16.msra.mxu0 %v825
        %1226 = vmatpush.bf16.msra.mxu0 %v821
        %1227 = vmatpush.bf16.msra.mxu0 %v817
        %1228 = vmatmul.bf16.gmra.mxu0 %v391
        %v1229 = vpop.f32.mrf.mxu0
        %v1230 = vadd.f32 %v1216, %v1229
        %v1231 = vpop.f32.mrf.mxu0
        %v1232 = vadd.f32 %v1218, %v1231
        %1233 = vdwg.mxu0
        %1234 = vmatpush.bf16.msra.mxu0 %v877
        %1235 = vmatpush.bf16.msra.mxu0 %v873
        %1236 = vmatpush.bf16.msra.mxu0 %v869
        %1237 = vmatpush.bf16.msra.mxu0 %v865
        %1238 = vmatpush.bf16.msra.mxu0 %v861
        %1239 = vmatpush.bf16.msra.mxu0 %v857
        %1240 = vmatpush.bf16.msra.mxu0 %v853
        %1241 = vmatpush.bf16.msra.mxu0 %v849
        %1242 = vmatmul.bf16.gmra.mxu0 %v392
        %v1243 = vpop.f32.mrf.mxu0
        %v1244 = vadd.f32 %v1230, %v1243
        %v1245 = vpop.f32.mrf.mxu0
        %v1246 = vadd.f32 %v1232, %v1245
        %1247 = vdwg.mxu0
        %1248 = vmatpush.bf16.msra.mxu0 %v909
        %1249 = vmatpush.bf16.msra.mxu0 %v905
        %1250 = vmatpush.bf16.msra.mxu0 %v901
        %1251 = vmatpush.bf16.msra.mxu0 %v897
        %1252 = vmatpush.bf16.msra.mxu0 %v893
        %1253 = vmatpush.bf16.msra.mxu0 %v889
        %1254 = vmatpush.bf16.msra.mxu0 %v885
        %1255 = vmatpush.bf16.msra.mxu0 %v881
        %1256 = vmatmul.bf16.gmra.mxu0 %v393
        %v1257 = vpop.f32.mrf.mxu0
        %v1258 = vadd.f32 %v1244, %v1257
        %v1259 = vpop.f32.mrf.mxu0
        %v1260 = vadd.f32 %v1246, %v1259
        %1261 = vdwg.mxu0
        %v1262 = vadd.f32 %v238, %v1090
        %v1263 = vadd.f32 %v239, %v1146
        %v1264 = vadd.f32 %v240, %v1202
        %v1265 = vadd.f32 %v241, %v1258
        %v1266 = vadd.f32 %v242, %v1092
        %v1267 = vadd.f32 %v243, %v1148
        %v1268 = vadd.f32 %v244, %v1204
        %v1269 = vadd.f32 %v245, %v1260
        %1270 = vst [vmem:[#allocation2] sm:$0xff] %v1262
        %1271 = vst [vmem:[#allocation2 + $0x8] sm:$0xff] %v1263
        %1272 = vst [vmem:[#allocation2 + $0x10] sm:$0xff] %v1264
        %1273 = vst [vmem:[#allocation2 + $0x18] sm:$0xff] %v1265
        %1274 = vst [vmem:[#allocation2 + $0x20] sm:$0xff] %v1266
        %1275 = vst [vmem:[#allocation2 + $0x28] sm:$0xff] %v1267
        %1276 = vst [vmem:[#allocation2 + $0x30] sm:$0xff] %v1268
        %1277 = vst [vmem:[#allocation2 + $0x38] sm:$0xff] %v1269
        // Predicated region
        $region41: #{tpu_custom_call.1} parent=27 // pred_check
          %p1278 = pneg %p226
        $region42: #{tpu_custom_call.1} parent=27 // pred_check_branch
          %1280 = sbr.rel (%p1278) target = $region44
        $region43: #{tpu_custom_call.1} parent=27 // pred_region
          %v1281 = vld [vmem:[#allocation2] sm:$0xff]
          %v1282 = vld [vmem:[#allocation2 + $0x8] sm:$0xff]
          %v1283 = vld [vmem:[#allocation2 + $0x10] sm:$0xff]
          %v1284 = vld [vmem:[#allocation2 + $0x18] sm:$0xff]
          %v1285 = vld [vmem:[#allocation2 + $0x20] sm:$0xff]
          %v1286 = vld [vmem:[#allocation2 + $0x28] sm:$0xff]
          %v1287 = vld [vmem:[#allocation2 + $0x30] sm:$0xff]
          %v1288 = vld [vmem:[#allocation2 + $0x38] sm:$0xff]
          %v1289 = vpack.c.bf16 %v1282, %v1281
          %v1290 = vpack.c.bf16 %v1284, %v1283
          %v1291 = vpack.c.bf16 %v1286, %v1285
          %v1292 = vpack.c.bf16 %v1288, %v1287
          %1293 = vst [vmem:[%s219] sm:$0xff] %v1289
          %1294 = vst [vmem:[%s219 + $0x8] sm:$0xff] %v1290
          %1295 = vst [vmem:[%s219 + $0x10] sm:$0xff] %v1291
          %1296 = vst [vmem:[%s219 + $0x18] sm:$0xff] %v1292
        $region44: #{tpu_custom_call.1} parent=27 // pred_fallthru
          _
        %s1297 = sand.u32 %s105, 1
        %s1298 = scalar_lea.sflag [#allocation5], %s1297
        %s1299 = sand.u32 %s105, 1
        %s1300 = smul.addr %s1299, 32
        %s1301 = scalar_lea.vmem [#allocation8], %s1300
        // Predicated region
        $region45: #{tpu_custom_call.1} parent=27 // pred_check
          %p1302 = pneg %p115
        $region46: #{tpu_custom_call.1} parent=27 // pred_check_branch
          %1304 = sbr.rel (%p1302) target = $region48
        $region47: #{tpu_custom_call.1} parent=27 // pred_region
          %s1305 = smul.u32 2, %s25
          %s1306 = smul.u32 4, %s26
          %1308 = vsyncadd %s1298, 0
          %s1309 = smul.addr %s1305, 8
          %s1310 = sadd.s32 %s1306, %s1309
          %s1311 = smul.addr %s1310, 4
          %s1312 = scalar_lea.hbm %s2, %s1311
          %s1313 = sshll.u32 %s1301, 4
          %s1314 = int_to_ptr.vmem [resolvable:$true] %s1313
          %s1315 = sshll.u32 %s1312, 4
          %s1316 = int_to_ptr.hbm [resolvable:$true] %s1315
          %1321 = dma.vmem_to_hbm [thread:$0]  %s1314, 512, %s1316, %s1298, 256, 512, 16
        $region48: #{tpu_custom_call.1} parent=27 // pred_fallthru
          _
      $region28: #{tpu_custom_call.1} parent=5 // pred_fallthru
        _
      %p1322 = scmp.le.s32.totalorder 2, %s15
      // Predicated region
      $region49: #{tpu_custom_call.1} parent=5 // pred_check
        %p1323 = pneg %p1322
      $region50: #{tpu_custom_call.1} parent=5 // pred_check_branch
        %1325 = sbr.rel (%p1323) target = $region52
      $region51: #{tpu_custom_call.1} parent=5 // pred_region
        %s1326 = ssub.s32 %s15, 2
        // Predicated region
        $region53: #{tpu_custom_call.1} parent=51 // pred_check
          %p1327 = pneg %p121
        $region54: #{tpu_custom_call.1} parent=51 // pred_check_branch
          %1329 = sbr.rel (%p1327) target = $region56
        $region55: #{tpu_custom_call.1} parent=51 // pred_region
          %s1330 = sand.u32 %s106, 1
          %s1331 = scalar_lea.sflag [#allocation5], %s1330
          %s1332 = sand.u32 %s106, 1
          %s1333 = smul.addr %s1332, 32
          %s1334 = scalar_lea.vmem [#allocation8], %s1333
          %1336 = dma.done %s1331, 512
        $region56: #{tpu_custom_call.1} parent=51 // pred_fallthru
          _
      $region52: #{tpu_custom_call.1} parent=5 // pred_fallthru
        _
    $region6: #{tpu_custom_call.1} parent=1 // loop_footer
      %s19 = sadd.s32 1, %s15
    $region7: #{tpu_custom_call.1} parent=1 // loop_footer_branch
      %14 = sbr.rel target = $region3
    $region8: #{tpu_custom_call.1} parent=1 // loop_exit
      _
    %1337 = vsyncpa [#allocation4], 1
    %s1338 = scalar_lea.sflag [#allocation4], 1
    %1339 = vsyncpa %s1338, 1
    %1340 = vsyncpa [#allocation7], 1
    %s1341 = scalar_lea.sflag [#allocation7], 1
    %1342 = vsyncpa %s1341, 1
    %1343 = vsyncpa [#allocation5], 1
    %s1344 = scalar_lea.sflag [#allocation5], 1
    %1345 = vsyncpa %s1344, 1

</llo_original>
